<compile_context>
chip_gen: v5e
topology: v5e:2x2
jax: 0.10.0
libtpu: 0.0.40
codegen_flags: <defaults>
</compile_context>

<pallas_src>
import jax
import jax.numpy as jnp
from jax.experimental import pallas as pl
from jax.experimental.pallas import tpu as pltpu

NUM_INPUTS = 784
NUM_OUTPUTS = 10


def _linear_kernel(x_ref, w_ref, b_ref, o_ref):
    # x_ref: (B, 784) f32, w_ref: (784, 10) f32, b_ref: (1, 10) f32,
    # o_ref: (B, 10) f32
    y = jnp.dot(x_ref[...], w_ref[...], preferred_element_type=jnp.float32)
    o_ref[...] = y + b_ref[...]          # f32 VPU add (v5e-safe)


def linear_net_forward(x_nchw, weight_t, bias):
    """Forward pass of LinearNet.

    x_nchw:   (B, C, H, W) float32, with C*H*W == 784  (NCHW, like PyTorch)
    weight_t: (784, 10) float32  (transpose of PyTorch's (10, 784) weight)
    bias:     (10,)     float32
    returns:  (B, 10)   float32 logits
    """
    B = x_nchw.shape[0]
    x_flat = x_nchw.reshape(B, -1)                 # x.view(x.shape[0], -1)
    assert x_flat.shape[1] == NUM_INPUTS

    bias2d = bias.reshape(1, NUM_OUTPUTS)

    # No grid: whole arrays (<~60 KB total) live in VMEM for the single
    # kernel invocation. All operands stay f32 (parity with PyTorch nn.Linear).
    vmem = pltpu.MemorySpace.VMEM
    out = pl.pallas_call(
        _linear_kernel,
        out_shape=jax.ShapeDtypeStruct((B, NUM_OUTPUTS), jnp.float32),
        in_specs=[
            pl.BlockSpec(memory_space=vmem),   # x
            pl.BlockSpec(memory_space=vmem),   # W
            pl.BlockSpec(memory_space=vmem),   # bias
        ],
        out_specs=pl.BlockSpec(memory_space=vmem),
    )(x_flat, weight_t, bias2d)
    return out


def init_params(key):
    """Deterministic parameter init matching nn.Linear's shapes.

    PyTorch nn.Linear(784, 10) has weight (10, 784) and bias (10,),
    initialized uniform in [-1/sqrt(784), 1/sqrt(784)]. We reproduce that
    distribution deterministically and store the weight transposed (784, 10).
    """
    k_w, k_b = jax.random.split(key)
    bound = 1.0 / jnp.sqrt(jnp.float32(NUM_INPUTS))
    weight = jax.random.uniform(
        k_w, (NUM_OUTPUTS, NUM_INPUTS), jnp.float32, -bound, bound)
    bias = jax.random.uniform(
        k_b, (NUM_OUTPUTS,), jnp.float32, -bound, bound)
    return weight.T, bias   # store transposed for x @ W


if __name__ == "__main__":
    key = jax.random.PRNGKey(0)
    k_x, k_p = jax.random.split(key)

    # Small MNIST-like batch: (B=8, C=1, H=28, W=28) -> flatten to (8, 784)
    x = jax.random.normal(k_x, (8, 1, 28, 28), dtype=jnp.float32)
    weight_t, bias = init_params(k_p)

    y = linear_net_forward(x, weight_t, bias)
    jax.block_until_ready(y)
    assert y.shape == (8, NUM_OUTPUTS)

    # Reference: full f32 math — tolerance is tight now that operands are f32.
    x_flat = x.reshape(x.shape[0], -1)
    y_ref = x_flat @ weight_t + bias[None, :]
    assert jnp.allclose(y, y_ref, atol=1e-4, rtol=1e-4)

    print("KERNEL_OK")
</pallas_src>

<mosaic_0001>
module attributes {stable_mosaic.version = 11 : i64} {
  func.func @_linear_kernel(%arg0: memref<8x784xf32, #tpu.memory_space<vmem>>, %arg1: memref<784x10xf32, #tpu.memory_space<vmem>>, %arg2: memref<1x10xf32, #tpu.memory_space<vmem>>, %arg3: memref<8x10xf32, #tpu.memory_space<vmem>>) attributes {dimension_semantics = [], scalar_prefetch = 0 : i64, scratch_operands = 0 : i64, tpu.core_type = #tpu.core_type<tc>} {
    %c0 = arith.constant 0 : index
    %c0_0 = arith.constant 0 : index
    %0 = vector.load %arg0[%c0, %c0_0] : memref<8x784xf32, #tpu.memory_space<vmem>>, vector<8x784xf32>
    %c0_1 = arith.constant 0 : index
    %c0_2 = arith.constant 0 : index
    %1 = vector.load %arg1[%c0_1, %c0_2] : memref<784x10xf32, #tpu.memory_space<vmem>>, vector<784x10xf32>
    %cst = arith.constant dense<0.000000e+00> : vector<8x10xf32>
    %2 = tpu.matmul %0, %1, %cst {dimension_numbers = #tpu.dot_dimension_numbers<[1], [0], [0], [1], [0, 0, 1, 1], [], []>} : vector<8x784xf32>, vector<784x10xf32>, vector<8x10xf32> -> vector<8x10xf32>
    %c0_3 = arith.constant 0 : index
    %c0_4 = arith.constant 0 : index
    %3 = vector.load %arg2[%c0_3, %c0_4] : memref<1x10xf32, #tpu.memory_space<vmem>>, vector<1x10xf32>
    %4 = vector.broadcast %3 : vector<1x10xf32> to vector<8x10xf32>
    %5 = arith.addf %2, %4 : vector<8x10xf32>
    %c0_5 = arith.constant 0 : index
    %c0_6 = arith.constant 0 : index
    %6 = vector.load %arg3[%c0_5, %c0_6] : memref<8x10xf32, #tpu.memory_space<vmem>>, vector<8x10xf32>
    tpu.vector_store %arg3[%c0_5, %c0_6], %5 {strides = array<i32>} : memref<8x10xf32, #tpu.memory_space<vmem>>, vector<8x10xf32>,
    return
  }
}

</mosaic_0001>

<llo_original>
// kernel: tpu_custom_call.1
$region0: #{tpu_custom_call.1}
  #allocation0 [shape = 'u32[]', space=smem, size = 0x4, offset = 0x4, fixed_abs, tag = 'smem constant byte address 0x4 - core index']
  #allocation1 [shape = 'u32[72,128]{1,0:T(1,128)}', space=vmem, size = 0x9000, scoped, tag = 'internal scratch']
  %s0 = inlined_call_operand.vmem [shape: f32[8,784], index: 0, kind: input, shape index: {}]
  %s1 = inlined_call_operand.vmem [shape: f32[784,10], index: 1, kind: input, shape index: {}]
  %s2 = inlined_call_operand.vmem [shape: f32[1,10], index: 2, kind: input, shape index: {}]
  %s3 = inlined_call_operand.hbm [shape: f32[8,10], index: 3, kind: output, shape index: {}]
  %s4 = sld [smem:[#allocation0]]
  $region22: #{tpu_custom_call.1} parent=0
    _
  %s6 = ssub.s32 1, %s4
  %s7 = scalar_select 0, %s6, %s4
  $region1: #{tpu_custom_call.1} parent=0
    #allocation2 [shape = 'u8[4096]{0}', space=vmem, size = 0x1000, scoped, tag = 'output window, operand 0, single buffered']
    #allocation3 [shape = 's32[1]{0}', space=sflag, size = 0x4, scoped, tag = 'scoped memory for tpu_custom_call.1']
    %8 = vsyncpa [#allocation3], 0
    // Predicated region
    $region2: #{tpu_custom_call.1} parent=1 // pred_check
      _
    $region3: #{tpu_custom_call.1} parent=1 // pred_check_branch
      %10 = sbr.rel (0) target = $region5
    $region4: #{tpu_custom_call.1} parent=1 // pred_region
      _
    $region5: #{tpu_custom_call.1} parent=1 // pred_fallthru
      _
    // Predicated region
    $region6: #{tpu_custom_call.1} parent=1 // pred_check
      _
    $region7: #{tpu_custom_call.1} parent=1 // pred_check_branch
      %12 = sbr.rel (0) target = $region9
    $region8: #{tpu_custom_call.1} parent=1 // pred_region
      _
    $region9: #{tpu_custom_call.1} parent=1 // pred_fallthru
      _
    // Predicated region
    $region10: #{tpu_custom_call.1} parent=1 // pred_check
      _
    $region11: #{tpu_custom_call.1} parent=1 // pred_check_branch
      %14 = sbr.rel (0) target = $region13
    $region12: #{tpu_custom_call.1} parent=1 // pred_region
      _
    $region13: #{tpu_custom_call.1} parent=1 // pred_fallthru
      _
    %v15 = vld [vmem:[%s0] sm:$0xff]
    %v16 = vld [vmem:[%s0 + $0x8] sm:$0xff]
    %v17 = vld [vmem:[%s0 + $0x10] sm:$0xff]
    %v18 = vld [vmem:[%s0 + $0x18] sm:$0xff]
    %v19 = vld [vmem:[%s0 + $0x20] sm:$0xff]
    %v20 = vld [vmem:[%s0 + $0x28] sm:$0xff]
    %v21 = vld [vmem:[%s0 + $0x30] sm:$0xff]
    %v22 = vld [vmem:[%s1] sm:$0xff]
    %v23 = vld [vmem:[%s1 + $0x8] sm:$0xff]
    %v24 = vld [vmem:[%s1 + $0x10] sm:$0xff]
    %v25 = vld [vmem:[%s1 + $0x18] sm:$0xff]
    %v26 = vld [vmem:[%s1 + $0x20] sm:$0xff]
    %v27 = vld [vmem:[%s1 + $0x28] sm:$0xff]
    %v28 = vld [vmem:[%s1 + $0x30] sm:$0xff]
    %v29 = vld [vmem:[%s1 + $0x38] sm:$0xff]
    %v30 = vld [vmem:[%s1 + $0x40] sm:$0xff]
    %v31 = vld [vmem:[%s1 + $0x48] sm:$0xff]
    %v32 = vld [vmem:[%s1 + $0x50] sm:$0xff]
    %v33 = vld [vmem:[%s1 + $0x58] sm:$0xff]
    %v34 = vld [vmem:[%s1 + $0x60] sm:$0xff]
    %v35 = vld [vmem:[%s1 + $0x68] sm:$0xff]
    %v36 = vld [vmem:[%s1 + $0x70] sm:$0xff]
    %v37 = vld [vmem:[%s1 + $0x78] sm:$0xff]
    %v38 = vld [vmem:[%s1 + $0x80] sm:$0xff]
    %v39 = vld [vmem:[%s1 + $0x88] sm:$0xff]
    %v40 = vld [vmem:[%s1 + $0x90] sm:$0xff]
    %v41 = vld [vmem:[%s1 + $0x98] sm:$0xff]
    %v42 = vld [vmem:[%s1 + $0xa0] sm:$0xff]
    %v43 = vld [vmem:[%s1 + $0xa8] sm:$0xff]
    %v44 = vld [vmem:[%s1 + $0xb0] sm:$0xff]
    %v45 = vld [vmem:[%s1 + $0xb8] sm:$0xff]
    %v46 = vld [vmem:[%s1 + $0xc0] sm:$0xff]
    %v47 = vld [vmem:[%s1 + $0xc8] sm:$0xff]
    %v48 = vld [vmem:[%s1 + $0xd0] sm:$0xff]
    %v49 = vld [vmem:[%s1 + $0xd8] sm:$0xff]
    %v50 = vld [vmem:[%s1 + $0xe0] sm:$0xff]
    %v51 = vld [vmem:[%s1 + $0xe8] sm:$0xff]
    %v52 = vld [vmem:[%s1 + $0xf0] sm:$0xff]
    %v53 = vld [vmem:[%s1 + $0xf8] sm:$0xff]
    %v54 = vld [vmem:[%s1 + $0x100] sm:$0xff]
    %v55 = vld [vmem:[%s1 + $0x108] sm:$0xff]
    %v56 = vld [vmem:[%s1 + $0x110] sm:$0xff]
    %v57 = vld [vmem:[%s1 + $0x118] sm:$0xff]
    %v58 = vld [vmem:[%s1 + $0x120] sm:$0xff]
    %v59 = vld [vmem:[%s1 + $0x128] sm:$0xff]
    %v60 = vld [vmem:[%s1 + $0x130] sm:$0xff]
    %v61 = vld [vmem:[%s1 + $0x138] sm:$0xff]
    %v62 = vld [vmem:[%s1 + $0x140] sm:$0xff]
    %v63 = vld [vmem:[%s1 + $0x148] sm:$0xff]
    %v64 = vld [vmem:[%s1 + $0x150] sm:$0xff]
    %v65 = vld [vmem:[%s1 + $0x158] sm:$0xff]
    %v66 = vld [vmem:[%s1 + $0x160] sm:$0xff]
    %v67 = vld [vmem:[%s1 + $0x168] sm:$0xff]
    %v68 = vld [vmem:[%s1 + $0x170] sm:$0xff]
    %v69 = vld [vmem:[%s1 + $0x178] sm:$0xff]
    %v70 = vld [vmem:[%s1 + $0x180] sm:$0xff]
    %v71 = vld [vmem:[%s1 + $0x188] sm:$0xff]
    %v72 = vld [vmem:[%s1 + $0x190] sm:$0xff]
    %v73 = vld [vmem:[%s1 + $0x198] sm:$0xff]
    %v74 = vld [vmem:[%s1 + $0x1a0] sm:$0xff]
    %v75 = vld [vmem:[%s1 + $0x1a8] sm:$0xff]
    %v76 = vld [vmem:[%s1 + $0x1b0] sm:$0xff]
    %v77 = vld [vmem:[%s1 + $0x1b8] sm:$0xff]
    %v78 = vld [vmem:[%s1 + $0x1c0] sm:$0xff]
    %v79 = vld [vmem:[%s1 + $0x1c8] sm:$0xff]
    %v80 = vld [vmem:[%s1 + $0x1d0] sm:$0xff]
    %v81 = vld [vmem:[%s1 + $0x1d8] sm:$0xff]
    %v82 = vld [vmem:[%s1 + $0x1e0] sm:$0xff]
    %v83 = vld [vmem:[%s1 + $0x1e8] sm:$0xff]
    %v84 = vld [vmem:[%s1 + $0x1f0] sm:$0xff]
    %v85 = vld [vmem:[%s1 + $0x1f8] sm:$0xff]
    %v86 = vld [vmem:[%s1 + $0x200] sm:$0xff]
    %v87 = vld [vmem:[%s1 + $0x208] sm:$0xff]
    %v88 = vld [vmem:[%s1 + $0x210] sm:$0xff]
    %v89 = vld [vmem:[%s1 + $0x218] sm:$0xff]
    %v90 = vld [vmem:[%s1 + $0x220] sm:$0xff]
    %v91 = vld [vmem:[%s1 + $0x228] sm:$0xff]
    %v92 = vld [vmem:[%s1 + $0x230] sm:$0xff]
    %v93 = vld [vmem:[%s1 + $0x238] sm:$0xff]
    %v94 = vld [vmem:[%s1 + $0x240] sm:$0xff]
    %v95 = vld [vmem:[%s1 + $0x248] sm:$0xff]
    %v96 = vld [vmem:[%s1 + $0x250] sm:$0xff]
    %v97 = vld [vmem:[%s1 + $0x258] sm:$0xff]
    %v98 = vld [vmem:[%s1 + $0x260] sm:$0xff]
    %v99 = vld [vmem:[%s1 + $0x268] sm:$0xff]
    %v100 = vld [vmem:[%s1 + $0x270] sm:$0xff]
    %v101 = vld [vmem:[%s1 + $0x278] sm:$0xff]
    %v102 = vld [vmem:[%s1 + $0x280] sm:$0xff]
    %v103 = vld [vmem:[%s1 + $0x288] sm:$0xff]
    %v104 = vld [vmem:[%s1 + $0x290] sm:$0xff]
    %v105 = vld [vmem:[%s1 + $0x298] sm:$0xff]
    %v106 = vld [vmem:[%s1 + $0x2a0] sm:$0xff]
    %v107 = vld [vmem:[%s1 + $0x2a8] sm:$0xff]
    %v108 = vld [vmem:[%s1 + $0x2b0] sm:$0xff]
    %v109 = vld [vmem:[%s1 + $0x2b8] sm:$0xff]
    %v110 = vld [vmem:[%s1 + $0x2c0] sm:$0xff]
    %v111 = vld [vmem:[%s1 + $0x2c8] sm:$0xff]
    %v112 = vld [vmem:[%s1 + $0x2d0] sm:$0xff]
    %v113 = vld [vmem:[%s1 + $0x2d8] sm:$0xff]
    %v114 = vld [vmem:[%s1 + $0x2e0] sm:$0xff]
    %v115 = vld [vmem:[%s1 + $0x2e8] sm:$0xff]
    %v116 = vld [vmem:[%s1 + $0x2f0] sm:$0xff]
    %v117 = vld [vmem:[%s1 + $0x2f8] sm:$0xff]
    %v118 = vld [vmem:[%s1 + $0x300] sm:$0xff]
    %v119 = vld [vmem:[%s1 + $0x308] sm:$0xff]
    %v120 = vld [vmem:[%s2] sm:$0x1]
    %v122 = vperm.slane %v120, 0
    %vm124 = vcmask 130048
    %v126 = vsel %vm124, %v21, 0
    %128 = vmatpush.msra.mxu0 %v37
    %129 = vmatpush.msra.mxu0 %v36
    %130 = vmatpush.msra.mxu0 %v35
    %131 = vmatpush.msra.mxu0 %v34
    %132 = vmatpush.msra.mxu0 %v33
    %133 = vmatpush.msra.mxu0 %v32
    %134 = vmatpush.msra.mxu0 %v31
    %135 = vmatpush.msra.mxu0 %v30
    %136 = vmatpush.msra.mxu0 %v29
    %137 = vmatpush.msra.mxu0 %v28
    %138 = vmatpush.msra.mxu0 %v27
    %139 = vmatpush.msra.mxu0 %v26
    %140 = vmatpush.msra.mxu0 %v25
    %141 = vmatpush.msra.mxu0 %v24
    %142 = vmatpush.msra.mxu0 %v23
    %143 = vmatpush.msra.mxu0 %v22
    %144 = vmatmul.f32.gmra.mxu0 %v15
    %v145 = vpop.f32.mrf.mxu0
    %v146 = vadd.f32 %v122, %v145
    %147 = vdwg.mxu0
    %148 = vmatpush.msra.mxu0 %v53
    %149 = vmatpush.msra.mxu0 %v52
    %150 = vmatpush.msra.mxu0 %v51
    %151 = vmatpush.msra.mxu0 %v50
    %152 = vmatpush.msra.mxu0 %v49
    %153 = vmatpush.msra.mxu0 %v48
    %154 = vmatpush.msra.mxu0 %v47
    %155 = vmatpush.msra.mxu0 %v46
    %156 = vmatpush.msra.mxu0 %v45
    %157 = vmatpush.msra.mxu0 %v44
    %158 = vmatpush.msra.mxu0 %v43
    %159 = vmatpush.msra.mxu0 %v42
    %160 = vmatpush.msra.mxu0 %v41
    %161 = vmatpush.msra.mxu0 %v40
    %162 = vmatpush.msra.mxu0 %v39
    %163 = vmatpush.msra.mxu0 %v38
    %164 = vmatmul.f32.gmra.mxu0 %v16
    %v165 = vpop.f32.mrf.mxu0
    %v166 = vadd.f32 %v146, %v165
    %167 = vdwg.mxu0
    %168 = vmatpush.msra.mxu0 %v69
    %169 = vmatpush.msra.mxu0 %v68
    %170 = vmatpush.msra.mxu0 %v67
    %171 = vmatpush.msra.mxu0 %v66
    %172 = vmatpush.msra.mxu0 %v65
    %173 = vmatpush.msra.mxu0 %v64
    %174 = vmatpush.msra.mxu0 %v63
    %175 = vmatpush.msra.mxu0 %v62
    %176 = vmatpush.msra.mxu0 %v61
    %177 = vmatpush.msra.mxu0 %v60
    %178 = vmatpush.msra.mxu0 %v59
    %179 = vmatpush.msra.mxu0 %v58
    %180 = vmatpush.msra.mxu0 %v57
    %181 = vmatpush.msra.mxu0 %v56
    %182 = vmatpush.msra.mxu0 %v55
    %183 = vmatpush.msra.mxu0 %v54
    %184 = vmatmul.f32.gmra.mxu0 %v17
    %v185 = vpop.f32.mrf.mxu0
    %v186 = vadd.f32 %v166, %v185
    %187 = vdwg.mxu0
    %188 = vmatpush.msra.mxu0 %v85
    %189 = vmatpush.msra.mxu0 %v84
    %190 = vmatpush.msra.mxu0 %v83
    %191 = vmatpush.msra.mxu0 %v82
    %192 = vmatpush.msra.mxu0 %v81
    %193 = vmatpush.msra.mxu0 %v80
    %194 = vmatpush.msra.mxu0 %v79
    %195 = vmatpush.msra.mxu0 %v78
    %196 = vmatpush.msra.mxu0 %v77
    %197 = vmatpush.msra.mxu0 %v76
    %198 = vmatpush.msra.mxu0 %v75
    %199 = vmatpush.msra.mxu0 %v74
    %200 = vmatpush.msra.mxu0 %v73
    %201 = vmatpush.msra.mxu0 %v72
    %202 = vmatpush.msra.mxu0 %v71
    %203 = vmatpush.msra.mxu0 %v70
    %204 = vmatmul.f32.gmra.mxu0 %v18
    %v205 = vpop.f32.mrf.mxu0
    %v206 = vadd.f32 %v186, %v205
    %207 = vdwg.mxu0
    %208 = vmatpush.msra.mxu0 %v101
    %209 = vmatpush.msra.mxu0 %v100
    %210 = vmatpush.msra.mxu0 %v99
    %211 = vmatpush.msra.mxu0 %v98
    %212 = vmatpush.msra.mxu0 %v97
    %213 = vmatpush.msra.mxu0 %v96
    %214 = vmatpush.msra.mxu0 %v95
    %215 = vmatpush.msra.mxu0 %v94
    %216 = vmatpush.msra.mxu0 %v93
    %217 = vmatpush.msra.mxu0 %v92
    %218 = vmatpush.msra.mxu0 %v91
    %219 = vmatpush.msra.mxu0 %v90
    %220 = vmatpush.msra.mxu0 %v89
    %221 = vmatpush.msra.mxu0 %v88
    %222 = vmatpush.msra.mxu0 %v87
    %223 = vmatpush.msra.mxu0 %v86
    %224 = vmatmul.f32.gmra.mxu0 %v19
    %v225 = vpop.f32.mrf.mxu0
    %v226 = vadd.f32 %v206, %v225
    %227 = vdwg.mxu0
    %228 = vmatpush.msra.mxu0 %v117
    %229 = vmatpush.msra.mxu0 %v116
    %230 = vmatpush.msra.mxu0 %v115
    %231 = vmatpush.msra.mxu0 %v114
    %232 = vmatpush.msra.mxu0 %v113
    %233 = vmatpush.msra.mxu0 %v112
    %234 = vmatpush.msra.mxu0 %v111
    %235 = vmatpush.msra.mxu0 %v110
    %236 = vmatpush.msra.mxu0 %v109
    %237 = vmatpush.msra.mxu0 %v108
    %238 = vmatpush.msra.mxu0 %v107
    %239 = vmatpush.msra.mxu0 %v106
    %240 = vmatpush.msra.mxu0 %v105
    %241 = vmatpush.msra.mxu0 %v104
    %242 = vmatpush.msra.mxu0 %v103
    %243 = vmatpush.msra.mxu0 %v102
    %244 = vmatmul.f32.gmra.mxu0 %v20
    %v245 = vpop.f32.mrf.mxu0
    %v246 = vadd.f32 %v226, %v245
    %247 = vdwg.mxu0
    %248 = vmatpush.msra.mxu0 0.0
    %249 = vmatpush.msra.mxu0 0.0
    %250 = vmatpush.msra.mxu0 0.0
    %251 = vmatpush.msra.mxu0 0.0
    %252 = vmatpush.msra.mxu0 0.0
    %253 = vmatpush.msra.mxu0 0.0
    %254 = vmatpush.msra.mxu0 0.0
    %255 = vmatpush.msra.mxu0 0.0
    %256 = vmatpush.msra.mxu0 0.0
    %257 = vmatpush.msra.mxu0 0.0
    %258 = vmatpush.msra.mxu0 0.0
    %259 = vmatpush.msra.mxu0 0.0
    %260 = vmatpush.msra.mxu0 0.0
    %261 = vmatpush.msra.mxu0 0.0
    %262 = vmatpush.msra.mxu0 %v119
    %263 = vmatpush.msra.mxu0 %v118
    %264 = vmatmul.f32.gmra.mxu0 %v126
    %v265 = vpop.f32.mrf.mxu0
    %v266 = vadd.f32 %v246, %v265
    %267 = vdwg.mxu0
    %vm268 = vcmask 80896
    %269 = vst.msk [vmem:[#allocation2] sm:$0xff] %vm268, %v266
    // Predicated region
    $region14: #{tpu_custom_call.1} parent=1 // pred_check
      _
    $region15: #{tpu_custom_call.1} parent=1 // pred_check_branch
      %271 = sbr.rel (0) target = $region17
    $region16: #{tpu_custom_call.1} parent=1 // pred_region
      %273 = vsyncadd [#allocation3], 0
      %s275 = sshll.u32 [#allocation2], 4
      %s276 = int_to_ptr.vmem [resolvable:$true] %s275
      %s277 = sshll.u32 %s3, 4
      %s278 = int_to_ptr.hbm [resolvable:$true] %s277
      %280 = dma.vmem_to_hbm [thread:$0]  %s276, 128, %s278, [#allocation3]
    $region17: #{tpu_custom_call.1} parent=1 // pred_fallthru
      _
    // Predicated region
    $region18: #{tpu_custom_call.1} parent=1 // pred_check
      _
    $region19: #{tpu_custom_call.1} parent=1 // pred_check_branch
      %282 = sbr.rel (0) target = $region21
    $region20: #{tpu_custom_call.1} parent=1 // pred_region
      %284 = dma.done [#allocation3], 128
    $region21: #{tpu_custom_call.1} parent=1 // pred_fallthru
      _
    %285 = vsyncpa [#allocation3], 1

</llo_original>
